<compile_context>
chip_gen: v7x
topology: tpu7x:2x2x1
jax: 0.10.0
libtpu: 0.0.40
codegen_flags: <defaults>
</compile_context>

<pallas_src>
import jax
import jax.numpy as jnp
from jax.experimental import pallas as pl
from jax.experimental.pallas import tpu as pltpu


def _global_attention_kernel(hidden_ref, enc_ref, params_ref, out_ref):
    """Fused GlobalAttention forward.

    hidden_ref : (B, Dh)        VMEM  decoder hidden state (native dtype)
    enc_ref    : (B, L, E)      VMEM  encoder outputs      (native dtype)
    params_ref : (rows_pad, H)  VMEM  packed parameter slab:
                   rows [0, E)        -> w_enc  = attn.weight[:, 2*Dh:].T
                   rows [E, E+Dh)     -> w_hid  = (attn.weight[:, :Dh] + attn.weight[:, Dh:2Dh]).T
                   row  E+Dh          -> attn bias
                   row  E+Dh+1        -> v.weight (scoring vector)
    out_ref    : (B, E)         VMEM  context vector
    """
    B, L, E = enc_ref.shape
    Dh = hidden_ref.shape[-1]
    H = params_ref.shape[-1]

    hidden = hidden_ref[...]                                # (B, Dh)
    enc = enc_ref[...]                                      # (B, L, E)

    # Static, zero-cost views into the packed parameter slab.
    w_enc = params_ref[0:E, :]                              # (E, H)
    w_hid = params_ref[E:E + Dh, :]                         # (Dh, H)
    bias = params_ref[E + Dh:E + Dh + 1, :].astype(jnp.float32)      # (1, H)
    v_vec = params_ref[E + Dh + 1:E + Dh + 2, :].astype(jnp.float32)  # (1, H)

    # repeated_hidden half of attn(): hidden @ (W1a + W1b).T, bias folded in
    # here so the add is done once per (B, H) and broadcast over L for free.
    hid_proj = jnp.dot(hidden, w_hid,
                       preferred_element_type=jnp.float32) + bias     # (B, H)

    # encoder_outputs half of attn(): one MXU matmul over all B*L rows.
    enc_proj = jnp.dot(enc.reshape(B * L, E), w_enc,
                       preferred_element_type=jnp.float32).reshape(B, L, H)

    # energy = tanh(attn(cat([repeated_hidden, enc])))      (EUP tanh, f32)
    energy = jnp.tanh(enc_proj + hid_proj[:, None, :])      # (B, L, H)

    # attention_scores = v(energy).squeeze(2): lane reduction over H.
    scores = jnp.sum(energy * v_vec.reshape(1, 1, H), axis=-1)         # (B, L)

    # softmax over the sequence axis (numerically stable; divide on the EUP).
    m = jnp.max(scores, axis=1, keepdims=True)
    e = jnp.exp(scores - m)
    denom = jnp.sum(e, axis=1, keepdims=True)
    weights = e * pl.reciprocal(denom, approx=True)                    # (B, L)

    # context_vector = sum_L encoder_outputs * weights
    ctx = jnp.sum(enc.astype(jnp.float32) * weights[:, :, None], axis=1)  # (B, E)
    out_ref[...] = ctx.astype(out_ref.dtype)


def prepare_global_attention_params(w_attn, b_attn, w_v, dtype=None):
    """Model-setup-time weight preparation (runs ONCE, outside the jitted forward).

    w_attn: (H, 2H) = attn.weight (torch layout); b_attn: (H,); w_v: (1, H) = v.weight.
    Folds the repeat(1, L, 2) + concat + Linear algebra into split, transposed
    weights and packs everything into a single sublane-padded slab:
        cat([h, h, enc]) @ W.T == h @ (W[:, :Dh] + W[:, Dh:2Dh]).T + enc @ W[:, 2Dh:].T
    For a bf16 model pass dtype=jnp.bfloat16 so the MXU consumes bf16 operands.
    """
    H = w_attn.shape[0]
    Dh = H // 2
    E = H
    if dtype is None:
        dtype = w_attn.dtype

    w_hid = (w_attn[:, :Dh] + w_attn[:, Dh:2 * Dh]).T       # (Dh, H)
    w_enc = w_attn[:, 2 * Dh:].T                             # (E, H)

    rows = E + Dh + 2
    rows_pad = -(-rows // 8) * 8                             # pad sublanes to x8
    slab = jnp.zeros((rows_pad, H), dtype)
    slab = slab.at[0:E, :].set(w_enc.astype(dtype))
    slab = slab.at[E:E + Dh, :].set(w_hid.astype(dtype))
    slab = slab.at[E + Dh, :].set(b_attn.reshape(-1).astype(dtype))
    slab = slab.at[E + Dh + 1, :].set(w_v.reshape(-1).astype(dtype))
    return jax.device_put(slab)


@jax.jit
def global_attention_forward(hidden, encoder_outputs, params_slab):
    """hidden: (B, Dh); encoder_outputs: (B, L, E); params_slab from prepare_*()."""
    B, _ = hidden.shape
    _, _, E = encoder_outputs.shape
    vmem = pl.BlockSpec(memory_space=pltpu.MemorySpace.VMEM)
    return pl.pallas_call(
        _global_attention_kernel,
        out_shape=jax.ShapeDtypeStruct((B, E), encoder_outputs.dtype),
        in_specs=[vmem, vmem, vmem],
        out_specs=vmem,
    )(hidden, encoder_outputs, params_slab)


def _reference(hidden, encoder_outputs, w_attn, b_attn, w_v):
    """Pure-JAX mirror of the PyTorch forward (correctness check)."""
    B, L, E = encoder_outputs.shape
    rep = jnp.tile(hidden[:, None, :], (1, L, 2))                       # repeat(1, L, 2)
    cat = jnp.concatenate([rep, encoder_outputs], axis=-1)              # (B, L, 2H)
    energy = jnp.tanh(cat @ w_attn.T + b_attn)                          # (B, L, H)
    scores = (energy @ w_v.T)[..., 0]                                   # (B, L)
    weights = jax.nn.softmax(scores, axis=1)
    return (encoder_outputs * weights[:, :, None]).sum(axis=1)          # (B, E)


if __name__ == "__main__":
    # Small shapes implied by the module: hidden_size=32, batch=2, seq len=8.
    hidden_size = 32
    B, L = 2, 8
    Dh = hidden_size // 2          # hidden feature dim (repeated x2 -> hidden_size)
    E = hidden_size                # encoder output feature dim

    key = jax.random.PRNGKey(0)
    k_h, k_e, k_wa, k_ba, k_wv = jax.random.split(key, 5)

    hidden = jax.random.normal(k_h, (B, Dh), jnp.float32)
    encoder_outputs = jax.random.normal(k_e, (B, L, E), jnp.float32)

    # torch.nn.Linear default init: U(-1/sqrt(fan_in), 1/sqrt(fan_in))
    ka = 1.0 / (2.0 * hidden_size) ** 0.5
    w_attn = jax.random.uniform(k_wa, (hidden_size, 2 * hidden_size), jnp.float32, -ka, ka)
    b_attn = jax.random.uniform(k_ba, (hidden_size,), jnp.float32, -ka, ka)
    kv = 1.0 / hidden_size ** 0.5
    w_v = jax.random.uniform(k_wv, (1, hidden_size), jnp.float32, -kv, kv)

    # Setup-time weight folding/packing (done once, outside the jitted forward).
    params_slab = prepare_global_attention_params(w_attn, b_attn, w_v)

    out = global_attention_forward(hidden, encoder_outputs, params_slab)
    jax.block_until_ready(out)

    assert out.shape == (B, E)
    assert out.dtype == encoder_outputs.dtype

    ref = _reference(hidden, encoder_outputs, w_attn, b_attn, w_v)
    # Slightly loose tolerance: pl.reciprocal(approx=True) shifts the softmax
    # normalization by ~1e-5..1e-4 relative vs exact division.
    assert jnp.allclose(out, ref, rtol=1e-3, atol=1e-3), \
        f"max abs err {jnp.max(jnp.abs(out - ref))}"

    print("KERNEL_OK")
</pallas_src>

<mosaic_0001>
module attributes {stable_mosaic.version = 11 : i64} {
  func.func @_global_attention_kernel(%arg0: memref<2x16xf32, #tpu.memory_space<vmem>>, %arg1: memref<2x8x32xf32, #tpu.memory_space<vmem>>, %arg2: memref<56x32xf32, #tpu.memory_space<vmem>>, %arg3: memref<2x32xf32, #tpu.memory_space<vmem>>) attributes {dimension_semantics = [], scalar_prefetch = 0 : i64, scratch_operands = 0 : i64, tpu.core_type = #tpu.core_type<tc>} {
    %c0 = arith.constant 0 : index
    %c0_0 = arith.constant 0 : index
    %0 = vector.load %arg0[%c0, %c0_0] : memref<2x16xf32, #tpu.memory_space<vmem>>, vector<2x16xf32>
    %c0_1 = arith.constant 0 : index
    %c0_2 = arith.constant 0 : index
    %c0_3 = arith.constant 0 : index
    %1 = vector.load %arg1[%c0_1, %c0_2, %c0_3] : memref<2x8x32xf32, #tpu.memory_space<vmem>>, vector<2x8x32xf32>
    %c0_4 = arith.constant 0 : index
    %c0_5 = arith.constant 0 : index
    %2 = vector.load %arg2[%c0_4, %c0_5] : memref<56x32xf32, #tpu.memory_space<vmem>>, vector<32x32xf32>
    %c32 = arith.constant 32 : index
    %c0_6 = arith.constant 0 : index
    %3 = vector.load %arg2[%c32, %c0_6] : memref<56x32xf32, #tpu.memory_space<vmem>>, vector<16x32xf32>
    %c48 = arith.constant 48 : index
    %c0_7 = arith.constant 0 : index
    %4 = vector.load %arg2[%c48, %c0_7] : memref<56x32xf32, #tpu.memory_space<vmem>>, vector<1x32xf32>
    %c49 = arith.constant 49 : index
    %c0_8 = arith.constant 0 : index
    %5 = vector.load %arg2[%c49, %c0_8] : memref<56x32xf32, #tpu.memory_space<vmem>>, vector<1x32xf32>
    %cst = arith.constant dense<0.000000e+00> : vector<2x32xf32>
    %6 = tpu.matmul %0, %3, %cst {dimension_numbers = #tpu.dot_dimension_numbers<[1], [0], [0], [1], [0, 0, 1, 1], [], []>} : vector<2x16xf32>, vector<16x32xf32>, vector<2x32xf32> -> vector<2x32xf32>
    %7 = vector.broadcast %4 : vector<1x32xf32> to vector<2x32xf32>
    %8 = arith.addf %6, %7 : vector<2x32xf32>
    %9 = vector.shape_cast %1 : vector<2x8x32xf32> to vector<16x32xf32>
    %cst_9 = arith.constant dense<0.000000e+00> : vector<16x32xf32>
    %10 = tpu.matmul %9, %2, %cst_9 {dimension_numbers = #tpu.dot_dimension_numbers<[1], [0], [0], [1], [0, 0, 1, 1], [], []>} : vector<16x32xf32>, vector<32x32xf32>, vector<16x32xf32> -> vector<16x32xf32>
    %11 = vector.shape_cast %10 : vector<16x32xf32> to vector<2x8x32xf32>
    %12 = vector.shape_cast %8 : vector<2x32xf32> to vector<2x1x32xf32>
    %13 = vector.broadcast %12 : vector<2x1x32xf32> to vector<2x8x32xf32>
    %14 = arith.addf %11, %13 : vector<2x8x32xf32>
    %15 = math.tanh %14 : vector<2x8x32xf32>
    %16 = vector.shape_cast %5 : vector<1x32xf32> to vector<1x1x32xf32>
    %17 = vector.broadcast %16 : vector<1x1x32xf32> to vector<2x8x32xf32>
    %18 = arith.mulf %15, %17 : vector<2x8x32xf32>
    %cst_10 = arith.constant dense<0.000000e+00> : vector<2x8xf32>
    %19 = vector.multi_reduction <add>, %18, %cst_10 [2] : vector<2x8x32xf32> to vector<2x8xf32>
    %cst_11 = arith.constant dense<0xFF800000> : vector<2xf32>
    %20 = vector.multi_reduction <maximumf>, %19, %cst_11 [1] : vector<2x8xf32> to vector<2xf32>
    %21 = vector.shape_cast %20 : vector<2xf32> to vector<2x1xf32>
    %22 = vector.broadcast %21 : vector<2x1xf32> to vector<2x8xf32>
    %23 = arith.subf %19, %22 : vector<2x8xf32>
    %24 = math.exp %23 : vector<2x8xf32>
    %cst_12 = arith.constant dense<0.000000e+00> : vector<2xf32>
    %25 = vector.multi_reduction <add>, %24, %cst_12 [1] : vector<2x8xf32> to vector<2xf32>
    %26 = vector.shape_cast %25 : vector<2xf32> to vector<2x1xf32>
    %27 = tpu.reciprocal %26 {approx = true} : vector<2x1xf32> -> vector<2x1xf32>
    %28 = vector.broadcast %27 : vector<2x1xf32> to vector<2x8xf32>
    %29 = arith.mulf %24, %28 : vector<2x8xf32>
    %30 = vector.shape_cast %29 : vector<2x8xf32> to vector<2x8x1xf32>
    %31 = vector.broadcast %30 : vector<2x8x1xf32> to vector<2x8x32xf32>
    %32 = arith.mulf %1, %31 : vector<2x8x32xf32>
    %cst_13 = arith.constant dense<0.000000e+00> : vector<2x32xf32>
    %33 = vector.multi_reduction <add>, %32, %cst_13 [1] : vector<2x8x32xf32> to vector<2x32xf32>
    %c0_14 = arith.constant 0 : index
    %c0_15 = arith.constant 0 : index
    %34 = vector.load %arg3[%c0_14, %c0_15] : memref<2x32xf32, #tpu.memory_space<vmem>>, vector<2x32xf32>
    tpu.vector_store %arg3[%c0_14, %c0_15], %33 {strides = array<i32>} : memref<2x32xf32, #tpu.memory_space<vmem>>, vector<2x32xf32>,
    return
  }
}

</mosaic_0001>

<llo_original>
// kernel: global_attention_forward.1
$region0: #{global_attention_forward.1}
  #allocation0 [shape = 'u32[]', space=smem, size = 0x4, offset = 0x4, fixed_abs, tag = 'smem constant byte address 0x4 - core index']
  #allocation1 [shape = 'u32[144,128]{1,0:T(1,128)}', space=vmem, size = 0x12000, scoped, tag = 'internal scratch']
  %s0 = inlined_call_operand.vmem [shape: f32[2,16], index: 0, kind: input, shape index: {}]
  %s1 = inlined_call_operand.vmem [shape: f32[2,8,32], index: 1, kind: input, shape index: {}]
  %s2 = inlined_call_operand.vmem [shape: f32[56,32], index: 2, kind: input, shape index: {}]
  %s3 = inlined_call_operand.hbm [shape: f32[2,32], index: 3, kind: output, shape index: {}]
  %s4 = sld [smem:[#allocation0]]
  $region22: #{global_attention_forward.1} parent=0
    _
  %s6 = ssub.s32 1, %s4
  %s7 = scalar_select 0, %s6, %s4
  $region1: #{global_attention_forward.1} parent=0
    #allocation2 [shape = 'u8[1024]{0}', space=vmem, size = 0x400, scoped, tag = 'output window, operand 0, single buffered']
    #allocation3 [shape = 's32[1]{0}', space=sflag, size = 0x4, scoped, tag = 'scoped memory for global_attention_forward.1']
    %8 = vsyncpa [#allocation3], 0
    // Predicated region
    $region2: #{global_attention_forward.1} parent=1 // pred_check
      _
    $region3: #{global_attention_forward.1} parent=1 // pred_check_branch
      %10 = sbr.rel (0) target = $region5
    $region4: #{global_attention_forward.1} parent=1 // pred_region
      _
    $region5: #{global_attention_forward.1} parent=1 // pred_fallthru
      _
    // Predicated region
    $region6: #{global_attention_forward.1} parent=1 // pred_check
      _
    $region7: #{global_attention_forward.1} parent=1 // pred_check_branch
      %12 = sbr.rel (0) target = $region9
    $region8: #{global_attention_forward.1} parent=1 // pred_region
      _
    $region9: #{global_attention_forward.1} parent=1 // pred_fallthru
      _
    // Predicated region
    $region10: #{global_attention_forward.1} parent=1 // pred_check
      _
    $region11: #{global_attention_forward.1} parent=1 // pred_check_branch
      %14 = sbr.rel (0) target = $region13
    $region12: #{global_attention_forward.1} parent=1 // pred_region
      _
    $region13: #{global_attention_forward.1} parent=1 // pred_fallthru
      _
    %v15 = vld [vmem:[%s0] sm:$0x3]
    %v16 = vld [vmem:[%s1] sm:$0xff]
    %v17 = vld [vmem:[%s1 + $0x8] sm:$0xff]
    %v18 = vld [vmem:[%s2] sm:$0xff]
    %v19 = vld [vmem:[%s2 + $0x8] sm:$0xff]
    %v20 = vld [vmem:[%s2 + $0x10] sm:$0xff]
    %v21 = vld [vmem:[%s2 + $0x18] sm:$0xff]
    %v22 = vld [vmem:[%s2 + $0x20] sm:$0xff]
    %v23 = vld [vmem:[%s2 + $0x28] sm:$0xff]
    %v24 = vld [vmem:[%s2 + $0x30] sm:$0x1]
    %v25 = vld [vmem:[%s2 + $0x31] sm:$0x1]
    %v26 = vlaneseq
    %v27 = vshrl.u32 %v26, 7
    %v28 = vsub.s32 0, %v27
    %v29 = vrot.slane %v24, %v28
    %vm30 = vcmask 130048
    %v32 = vsel %vm30, %v15, 0
    %34 = vmatprep.subr.mxu0 0.0
    %35 = vmatpush1.msra.mxu0 %v22
    %36 = vmatprep.subr.mxu0 0.0
    %37 = vmatpush1.msra.mxu0 %v23
    %38 = vmatprep.subr.mxu0 0.0
    %39 = vmatpush1.msra.mxu0 0.0
    %40 = vmatprep.subr.mxu0 0.0
    %41 = vmatpush1.msra.mxu0 0.0
    %42 = vmatprep.subr.mxu0 0.0
    %43 = vmatpush1.msra.mxu0 0.0
    %44 = vmatprep.subr.mxu0 0.0
    %45 = vmatpush1.msra.mxu0 0.0
    %46 = vmatprep.subr.mxu0 0.0
    %47 = vmatpush1.msra.mxu0 0.0
    %48 = vmatprep.subr.mxu0 0.0
    %49 = vmatpush1.msra.mxu0 0.0
    %50 = vmatprep.subr.mxu0 0.0
    %51 = vmatpush1.msra.mxu0 0.0
    %52 = vmatprep.subr.mxu0 0.0
    %53 = vmatpush1.msra.mxu0 0.0
    %54 = vmatprep.subr.mxu0 0.0
    %55 = vmatpush1.msra.mxu0 0.0
    %56 = vmatprep.subr.mxu0 0.0
    %57 = vmatpush1.msra.mxu0 0.0
    %58 = vmatprep.subr.mxu0 0.0
    %59 = vmatpush1.msra.mxu0 0.0
    %60 = vmatprep.subr.mxu0 0.0
    %61 = vmatpush1.msra.mxu0 0.0
    %62 = vmatprep.subr.mxu0 0.0
    %63 = vmatpush1.msra.mxu0 0.0
    %64 = vmatprep.subr.mxu0 0.0
    %65 = vmatpush1.msra.mxu0 0.0
    %66 = vmatprep.subr.mxu0 0.0
    %67 = vmatpush1.msra.mxu0 0.0
    %68 = vmatprep.subr.mxu0 0.0
    %69 = vmatpush1.msra.mxu0 0.0
    %70 = vmatprep.subr.mxu0 0.0
    %71 = vmatpush1.msra.mxu0 0.0
    %72 = vmatprep.subr.mxu0 0.0
    %73 = vmatpush1.msra.mxu0 0.0
    %74 = vmatprep.subr.mxu0 0.0
    %75 = vmatpush1.msra.mxu0 0.0
    %76 = vmatprep.subr.mxu0 0.0
    %77 = vmatpush1.msra.mxu0 0.0
    %78 = vmatprep.subr.mxu0 0.0
    %79 = vmatpush1.msra.mxu0 0.0
    %80 = vmatprep.subr.mxu0 0.0
    %81 = vmatpush1.msra.mxu0 0.0
    %82 = vmatprep.subr.mxu0 0.0
    %83 = vmatpush1.msra.mxu0 0.0
    %84 = vmatprep.subr.mxu0 0.0
    %85 = vmatpush1.msra.mxu0 0.0
    %86 = vmatprep.subr.mxu0 0.0
    %87 = vmatpush1.msra.mxu0 0.0
    %88 = vmatprep.subr.mxu0 0.0
    %89 = vmatpush1.msra.mxu0 0.0
    %90 = vmatprep.subr.mxu0 0.0
    %91 = vmatpush1.msra.mxu0 0.0
    %92 = vmatprep.subr.mxu0 0.0
    %93 = vmatpush1.msra.mxu0 0.0
    %94 = vmatprep.subr.mxu0 0.0
    %95 = vmatpush1.msra.mxu0 0.0
    %96 = vmatprep.subr.mxu0 0.0
    %97 = vmatpush1.msra.mxu0 0.0
    %98 = vmatprep.mubr.f32.mxu0 0.0
    %99 = vmatmul.mubr.f32.gmra.mrb[0].mxu0 %v32
    %v100 = vpop.f32.mrb[0].mxu0
    %v101 = vadd.f32 %v29, %v100
    %v102 = vpop.f32.mrb[0].mxu0
    %103 = vdwg.mxu0
    %vm104 = vcmask 261120
    %v106 = vsel %vm104, %v16, 0
    %v109 = vsel %vm104, %v17, 0
    %111 = vmatprep.subr.mxu0 0.0
    %112 = vmatpush1.msra.mxu0 %v18
    %113 = vmatprep.subr.mxu0 0.0
    %114 = vmatpush1.msra.mxu0 %v19
    %115 = vmatprep.subr.mxu0 0.0
    %116 = vmatpush1.msra.mxu0 %v20
    %117 = vmatprep.subr.mxu0 0.0
    %118 = vmatpush1.msra.mxu0 %v21
    %119 = vmatprep.subr.mxu0 0.0
    %120 = vmatpush1.msra.mxu0 0.0
    %121 = vmatprep.subr.mxu0 0.0
    %122 = vmatpush1.msra.mxu0 0.0
    %123 = vmatprep.subr.mxu0 0.0
    %124 = vmatpush1.msra.mxu0 0.0
    %125 = vmatprep.subr.mxu0 0.0
    %126 = vmatpush1.msra.mxu0 0.0
    %127 = vmatprep.subr.mxu0 0.0
    %128 = vmatpush1.msra.mxu0 0.0
    %129 = vmatprep.subr.mxu0 0.0
    %130 = vmatpush1.msra.mxu0 0.0
    %131 = vmatprep.subr.mxu0 0.0
    %132 = vmatpush1.msra.mxu0 0.0
    %133 = vmatprep.subr.mxu0 0.0
    %134 = vmatpush1.msra.mxu0 0.0
    %135 = vmatprep.subr.mxu0 0.0
    %136 = vmatpush1.msra.mxu0 0.0
    %137 = vmatprep.subr.mxu0 0.0
    %138 = vmatpush1.msra.mxu0 0.0
    %139 = vmatprep.subr.mxu0 0.0
    %140 = vmatpush1.msra.mxu0 0.0
    %141 = vmatprep.subr.mxu0 0.0
    %142 = vmatpush1.msra.mxu0 0.0
    %143 = vmatprep.subr.mxu0 0.0
    %144 = vmatpush1.msra.mxu0 0.0
    %145 = vmatprep.subr.mxu0 0.0
    %146 = vmatpush1.msra.mxu0 0.0
    %147 = vmatprep.subr.mxu0 0.0
    %148 = vmatpush1.msra.mxu0 0.0
    %149 = vmatprep.subr.mxu0 0.0
    %150 = vmatpush1.msra.mxu0 0.0
    %151 = vmatprep.subr.mxu0 0.0
    %152 = vmatpush1.msra.mxu0 0.0
    %153 = vmatprep.subr.mxu0 0.0
    %154 = vmatpush1.msra.mxu0 0.0
    %155 = vmatprep.subr.mxu0 0.0
    %156 = vmatpush1.msra.mxu0 0.0
    %157 = vmatprep.subr.mxu0 0.0
    %158 = vmatpush1.msra.mxu0 0.0
    %159 = vmatprep.subr.mxu0 0.0
    %160 = vmatpush1.msra.mxu0 0.0
    %161 = vmatprep.subr.mxu0 0.0
    %162 = vmatpush1.msra.mxu0 0.0
    %163 = vmatprep.subr.mxu0 0.0
    %164 = vmatpush1.msra.mxu0 0.0
    %165 = vmatprep.subr.mxu0 0.0
    %166 = vmatpush1.msra.mxu0 0.0
    %167 = vmatprep.subr.mxu0 0.0
    %168 = vmatpush1.msra.mxu0 0.0
    %169 = vmatprep.subr.mxu0 0.0
    %170 = vmatpush1.msra.mxu0 0.0
    %171 = vmatprep.subr.mxu0 0.0
    %172 = vmatpush1.msra.mxu0 0.0
    %173 = vmatprep.subr.mxu0 0.0
    %174 = vmatpush1.msra.mxu0 0.0
    %175 = vmatprep.mubr.f32.mxu0 0.0
    %176 = vmatmul.mubr.f32.gmra.mrb[0].mxu0 %v106
    %v177 = vpop.f32.mrb[0].mxu0
    %v178 = vadd.f32 0.0, %v177
    %v179 = vpop.f32.mrb[0].mxu0
    %180 = vmatprep.mubr.f32.mxu0 0.0
    %181 = vmatmul.mubr.f32.gmra.mrb[0].mxu0 %v109
    %v182 = vpop.f32.mrb[0].mxu0
    %v183 = vadd.f32 0.0, %v182
    %v184 = vpop.f32.mrb[0].mxu0
    %185 = vdwg.mxu0
    %v188 = vunpack.c.l.s4 1966171168
    %v189 = vunpack.c.0.s8 %v188
    %v190 = vlaneseq
    %v191 = vshrl.u32 %v190, 7
    %v192 = vsub.s32 %v189, %v191
    %v193 = vrot.slane %v101, %v192
    %v194 = vcombine.high %v193, %v193
    %v196 = vunpack.c.l.s4 1966171168
    %v197 = vunpack.c.0.s8 %v196
    %v198 = vlaneseq
    %v199 = vshrl.u32 %v198, 7
    %v200 = vsub.s32 %v197, %v199
    %v201 = vrot.slane %v193, %v200
    %v203 = vunpack.c.l.s4 1966171168
    %v204 = vunpack.c.0.s8 %v203
    %v205 = vlaneseq
    %v206 = vshrl.u32 %v205, 7
    %v207 = vsub.s32 %v204, %v206
    %v208 = vrot.slane %v194, %v207
    %v209 = vlaneseq
    %v210 = vshrl.u32 %v209, 7
    %v211 = vsub.s32 0, %v210
    %v212 = vrot.slane %v201, %v211
    %v213 = vlaneseq
    %v214 = vshrl.u32 %v213, 7
    %v215 = vsub.s32 0, %v214
    %v216 = vrot.slane %v208, %v215
    %v219 = vadd.f32 %v178, %v212
    %v220 = vadd.f32 %v183, %v216
    %v221 = vtanh.pop %v219
    %v222 = vtanh.pop %v220
    %v223 = vlaneseq
    %v224 = vshrl.u32 %v223, 7
    %v225 = vsub.s32 0, %v224
    %v226 = vrot.slane %v25, %v225
    %v227 = vmul.f32 %v221, %v226
    %v228 = vmul.f32 %v222, %v226
    %v229 = vsel %vm104, %v227, 0.0
    %230 = vadd.xlane.f32.xlu0 %v229
    %v231 = vpop.xlane.xlu0 %230
    %v232 = vsel %vm104, %v228, 0.0
    %233 = vadd.xlane.f32.xlu0 %v232
    %v234 = vpop.xlane.xlu0 %233
    %v237 = vlaneseq
    %v238 = vand.u32 %v237, 127
    %v239 = vlaneseq
    %v240 = vshrl.u32 %v239, 7
    %v241 = vsub.s32 %v238, %v240
    %v242 = vrot.slane %v231, %v241
    %v243 = vlaneseq
    %v244 = vshrl.u32 %v243, 7
    %v245 = vsub.s32 %v238, %v244
    %v246 = vrot.slane %v234, %v245
    %vm247 = vcmask 1041409
    %v248 = vsel %vm247, %v246, %v242
    %vm250 = vcmask 58368
    %v251 = vsel %vm250, %v248, -inf
    %252 = vmax.xlane.f32.xlu0 %v251
    %v253 = vpop.xlane.xlu0 %252
    %v255 = vlaneseq
    %v256 = vshrl.u32 %v255, 7
    %v257 = vsub.s32 0, %v256
    %v258 = vrot.slane %v253, %v257
    %v259 = vlaneseq
    %v260 = vshrl.u32 %v259, 7
    %v261 = vsub.s32 1, %v260
    %v262 = vrot.slane %v253, %v261
    %v265 = vsub.f32 %v231, %v258
    %v266 = vsub.f32 %v234, %v262
    %v267 = vmul.f32 %v265, 1.442695
    %v268 = vpow.pop %v267
    %v269 = vmul.f32 %v266, 1.442695
    %v270 = vpow.pop %v269
    %273 = vset.pattern.permute.xlu0 0
    %274 = vperm.xlu0 %273, %v268
    %v275 = vpop.permute.xlu0 %274
    %276 = vset.pattern.permute.xlu0 0
    %277 = vperm.xlu0 %276, %v270
    %v278 = vpop.permute.xlu0 %277
    %v279 = vlaneseq
    %v280 = vshrl.u32 %v279, 7
    %v281 = vsub.s32 %v238, %v280
    %v282 = vrot.slane %v275, %v281
    %v283 = vlaneseq
    %v284 = vshrl.u32 %v283, 7
    %v285 = vsub.s32 %v238, %v284
    %v286 = vrot.slane %v278, %v285
    %v287 = vsel %vm247, %v286, %v282
    %v289 = vsel %vm250, %v287, 0.0
    %290 = vadd.xlane.f32.xlu0 %v289
    %v291 = vpop.xlane.xlu0 %290
    %v292 = vrcp.pop %v291
    %v294 = vlaneseq
    %v295 = vshrl.u32 %v294, 7
    %v296 = vsub.s32 0, %v295
    %v297 = vrot.slane %v292, %v296
    %v298 = vlaneseq
    %v299 = vshrl.u32 %v298, 7
    %v300 = vsub.s32 1, %v299
    %v301 = vrot.slane %v292, %v300
    %v304 = vmul.f32 %v268, %v297
    %v305 = vmul.f32 %v270, %v301
    %307 = vset.pattern.permute.xlu0 0
    %308 = vperm.xlu0 %307, %v304
    %v309 = vpop.permute.xlu0 %308
    %312 = vset.pattern.permute.xlu0 0
    %313 = vperm.xlu0 %312, %v305
    %v314 = vpop.permute.xlu0 %313
    %v316 = vmul.f32 %v16, %v309
    %v317 = vmul.f32 %v17, %v314
    %v318 = vsel %vm104, %v316, 0.0
    %v319 = vrot.slane %v318, 4
    %v320 = vadd.f32 %v318, %v319
    %v321 = vrot.slane %v320, 2
    %v322 = vadd.f32 %v320, %v321
    %v323 = vrot.slane %v322, 1
    %v324 = vadd.f32 %v322, %v323
    %v325 = vsel %vm104, %v317, 0.0
    %v326 = vrot.slane %v325, 4
    %v327 = vadd.f32 %v325, %v326
    %v328 = vrot.slane %v327, 2
    %v329 = vadd.f32 %v327, %v328
    %v330 = vrot.slane %v329, 1
    %v331 = vadd.f32 %v329, %v330
    %v334 = vsel %vm247, %v331, %v324
    %vm336 = vcmask 254976
    %337 = vst.msk [vmem:[#allocation2] sm:$0x3] %vm336, %v334
    // Predicated region
    $region14: #{global_attention_forward.1} parent=1 // pred_check
      _
    $region15: #{global_attention_forward.1} parent=1 // pred_check_branch
      %339 = sbr.rel (0) target = $region17
    $region16: #{global_attention_forward.1} parent=1 // pred_region
      %s341 = ssub.s32 32, 32
      %342 = vsyncadd [#allocation3], %s341
      %s344 = sshll.u32 [#allocation2], 4
      %s345 = int_to_ptr.vmem [resolvable:$true] %s344
      %347 = dma.vmem_to_hbm [thread:$0]  %s345, 32, %s3, [#allocation3]
    $region17: #{global_attention_forward.1} parent=1 // pred_fallthru
      _
    // Predicated region
    $region18: #{global_attention_forward.1} parent=1 // pred_check
      _
    $region19: #{global_attention_forward.1} parent=1 // pred_check_branch
      %349 = sbr.rel (0) target = $region21
    $region20: #{global_attention_forward.1} parent=1 // pred_region
      %350 = dma.done [#allocation3], 32
    $region21: #{global_attention_forward.1} parent=1 // pred_fallthru
      _
    %351 = vsyncpa [#allocation3], 1

</llo_original>
